<compile_context>
chip_gen: v6e
topology: v6e:2x2x1
jax: 0.10.0
libtpu: 0.0.40
codegen_flags: <defaults>
</compile_context>

<pallas_src>
import functools

import jax
import jax.numpy as jnp
from jax.experimental import pallas as pl
from jax.experimental.pallas import tpu as pltpu

NEG_SLOPE = 0.01  # PyTorch nn.LeakyReLU default


def _leaky_relu(x):
    return jnp.where(x > 0, x, NEG_SLOPE * x)


def _round_up(n, m):
    return ((n + m - 1) // m) * m


def ann_kernel(x_ref, w1_ref, b1_ref, w2_ref, b2_ref, w3_ref, b3_ref, o_ref,
               *, n_out):
    # Fused MLP tile: 3 MXU matmuls (bf16 inputs, f32 accumulation) with the
    # bias adds / LeakyReLU as VPU filler.  Only the real `n_out` output
    # columns are stored (narrow, lane-masked store; kernel is HBM-bound so
    # this is the cheapest option).
    x = x_ref[...].astype(jnp.bfloat16)                               # (Bt, T)
    h1 = jnp.dot(x, w1_ref[...], preferred_element_type=jnp.float32) + b1_ref[...]
    h1 = _leaky_relu(h1)                                              # (Bt, 128) f32
    h2 = jnp.dot(h1.astype(jnp.bfloat16), w2_ref[...],
                 preferred_element_type=jnp.float32) + b2_ref[...]
    h2 = _leaky_relu(h2)                                              # (Bt, 64) f32
    h3 = jnp.dot(h2.astype(jnp.bfloat16), w3_ref[...],
                 preferred_element_type=jnp.float32)                  # (Bt, 128) f32
    o_ref[...] = h3[:, :n_out] + b3_ref[...]                          # (Bt, n_out)


def prepare_params(params):
    """One-time weight prep (bf16 casts + MXU-friendly w3 padding)."""
    w1, b1, w2, b2, w3, b3 = params
    class_size = w3.shape[1]
    n_pad = _round_up(class_size, 128)
    w3p = jnp.zeros((w3.shape[0], n_pad), w3.dtype).at[:, :class_size].set(w3)
    return (w1.astype(jnp.bfloat16), b1.astype(jnp.float32),
            w2.astype(jnp.bfloat16), b2.astype(jnp.float32),
            w3p.astype(jnp.bfloat16), b3.astype(jnp.float32),
            class_size)


def ann_forward(x, prepared, *, b_tile=1024):
    """x: (B, target_size) float32. Returns flattened (B * class_size,) float32."""
    w1c, b1, w2c, b2, w3c, b3, class_size = prepared
    B, T = x.shape

    # Batch tiling: sublane-aligned (f32: 8), at most the (rounded-up) batch,
    # and for B >= 16 at least 2 grid steps so the megacore split has work.
    b_tile = max(8, min(b_tile, _round_up(B, 8)))
    if B >= 16:
        b_tile = min(b_tile, _round_up(pl.cdiv(B, 2), 8))
    grid = (pl.cdiv(B, b_tile),)

    flops = 2 * B * (T * 128 + 128 * 64 + 64 * w3c.shape[1])
    bytes_accessed = (x.size * 4
                      + w1c.size * 2 + w2c.size * 2 + w3c.size * 2
                      + b1.size * 4 + b2.size * 4 + b3.size * 4
                      + B * class_size * 4)

    def resident(a):
        # Constant block index -> Pallas keeps it in VMEM across grid steps.
        return pl.BlockSpec(a.shape, lambda i: (0,) * a.ndim)

    kernel = functools.partial(ann_kernel, n_out=class_size)

    out = pl.pallas_call(
        kernel,
        out_shape=jax.ShapeDtypeStruct((B, class_size), jnp.float32),
        grid=grid,
        in_specs=[
            pl.BlockSpec((b_tile, T), lambda i: (i, 0)),
            resident(w1c), resident(b1),
            resident(w2c), resident(b2),
            resident(w3c), resident(b3),
        ],
        out_specs=pl.BlockSpec((b_tile, class_size), lambda i: (i, 0)),
        compiler_params=pltpu.CompilerParams(
            dimension_semantics=("parallel",),      # megacore split on v7x
        ),
        cost_estimate=pl.CostEstimate(
            flops=flops, transcendentals=0, bytes_accessed=bytes_accessed),
    )(x, w1c, b1, w2c, b2, w3c, b3)

    # Contiguous flatten, exactly like torch `.reshape(-1)`.
    return out.reshape(-1)


def init_params(key, target_size, class_size):
    """Deterministic init. Weights stored as (in, out); biases as (1, out)."""
    def linear_init(k, fan_in, fan_out):
        kw, kb = jax.random.split(k)
        bound = 1.0 / jnp.sqrt(fan_in)  # same scaling as torch.nn.Linear default
        w = jax.random.uniform(kw, (fan_in, fan_out), jnp.float32, -bound, bound)
        b = jax.random.uniform(kb, (1, fan_out), jnp.float32, -bound, bound)
        return w, b

    k1, k2, k3 = jax.random.split(key, 3)
    w1, b1 = linear_init(k1, target_size, 128)
    w2, b2 = linear_init(k2, 128, 64)
    w3, b3 = linear_init(k3, 64, class_size)
    return (w1, b1, w2, b2, w3, b3)


def _reference(x, params):
    # Pure-JAX reference with the SAME bf16 input quantization as the kernel
    # (f32 accumulation), so tolerances stay tight.
    w1, b1, w2, b2, w3, b3 = params
    q = lambda a: a.astype(jnp.bfloat16).astype(jnp.float32)
    hp = jax.lax.Precision.HIGHEST
    h = _leaky_relu(jnp.dot(q(x), q(w1), precision=hp) + b1)
    h = _leaky_relu(jnp.dot(q(h), q(w2), precision=hp) + b2)
    return (jnp.dot(q(h), q(w3), precision=hp) + b3).reshape(-1)


# TODO(synk): `ANN.get_indices` references `self.indices`, which the PyTorch
# module never defines; only the forward pass is implemented here.

if __name__ == "__main__":
    key = jax.random.PRNGKey(0)
    k_x, k_x2, k_p = jax.random.split(key, 3)

    target_size = 32
    class_size = 4
    params = init_params(k_p, target_size, class_size)
    prepared = prepare_params(params)

    # --- small smoke test (single grid step) ---
    batch = 8
    x = jax.random.normal(k_x, (batch, target_size), dtype=jnp.float32)
    out = ann_forward(x, prepared)
    jax.block_until_ready(out)
    ref = _reference(x, params)
    assert out.shape == (batch * class_size,)
    assert jnp.allclose(out, ref, atol=5e-3, rtol=5e-3), \
        float(jnp.max(jnp.abs(out - ref)))

    # --- multi-tile test: grid > 1 + ragged last block (no batch padding) ---
    batch2 = 1000
    x2 = jax.random.normal(k_x2, (batch2, target_size), dtype=jnp.float32)
    out2 = ann_forward(x2, prepared, b_tile=256)   # grid=(4,), last block ragged
    jax.block_until_ready(out2)
    ref2 = _reference(x2, params)
    assert out2.shape == (batch2 * class_size,)
    assert jnp.allclose(out2, ref2, atol=5e-3, rtol=5e-3), \
        float(jnp.max(jnp.abs(out2 - ref2)))

    print("KERNEL_OK")
</pallas_src>

<mosaic_0001>
module attributes {stable_mosaic.version = 11 : i64} {
  func.func @ann_kernel(%arg0: i32, %arg1: memref<8x32xf32, #tpu.memory_space<vmem>>, %arg2: memref<32x128xbf16, #tpu.memory_space<vmem>>, %arg3: memref<1x128xf32, #tpu.memory_space<vmem>>, %arg4: memref<128x64xbf16, #tpu.memory_space<vmem>>, %arg5: memref<1x64xf32, #tpu.memory_space<vmem>>, %arg6: memref<64x128xbf16, #tpu.memory_space<vmem>>, %arg7: memref<1x4xf32, #tpu.memory_space<vmem>>, %arg8: memref<8x4xf32, #tpu.memory_space<vmem>>) attributes {dimension_semantics = [#tpu.dimension_semantics<parallel>], iteration_bounds = array<i64: 1>, scalar_prefetch = 0 : i64, scratch_operands = 0 : i64, tpu.core_type = #tpu.core_type<tc>, window_params = [{transform_indices = @transform_0, window_bounds = array<i64: 8, 32>}, {pipeline_mode = #tpu.pipeline_mode<synchronous>, transform_indices = @transform_1, window_bounds = array<i64: 32, 128>}, {pipeline_mode = #tpu.pipeline_mode<synchronous>, transform_indices = @transform_2, window_bounds = array<i64: 1, 128>}, {pipeline_mode = #tpu.pipeline_mode<synchronous>, transform_indices = @transform_3, window_bounds = array<i64: 128, 64>}, {pipeline_mode = #tpu.pipeline_mode<synchronous>, transform_indices = @transform_4, window_bounds = array<i64: 1, 64>}, {pipeline_mode = #tpu.pipeline_mode<synchronous>, transform_indices = @transform_5, window_bounds = array<i64: 64, 128>}, {pipeline_mode = #tpu.pipeline_mode<synchronous>, transform_indices = @transform_6, window_bounds = array<i64: 1, 4>}, {transform_indices = @transform_7, window_bounds = array<i64: 8, 4>}]} {
    %c0 = arith.constant 0 : index
    %c0_0 = arith.constant 0 : index
    %0 = vector.load %arg1[%c0, %c0_0] : memref<8x32xf32, #tpu.memory_space<vmem>>, vector<8x32xf32>
    %1 = arith.truncf %0 : vector<8x32xf32> to vector<8x32xbf16>
    %c0_1 = arith.constant 0 : index
    %c0_2 = arith.constant 0 : index
    %2 = vector.load %arg2[%c0_1, %c0_2] : memref<32x128xbf16, #tpu.memory_space<vmem>>, vector<32x128xbf16>
    %cst = arith.constant dense<0.000000e+00> : vector<8x128xf32>
    %3 = tpu.matmul %1, %2, %cst {dimension_numbers = #tpu.dot_dimension_numbers<[1], [0], [0], [1], [0, 0, 1, 1], [], []>} : vector<8x32xbf16>, vector<32x128xbf16>, vector<8x128xf32> -> vector<8x128xf32>
    %c0_3 = arith.constant 0 : index
    %c0_4 = arith.constant 0 : index
    %4 = vector.load %arg3[%c0_3, %c0_4] : memref<1x128xf32, #tpu.memory_space<vmem>>, vector<1x128xf32>
    %5 = vector.broadcast %4 : vector<1x128xf32> to vector<8x128xf32>
    %6 = arith.addf %3, %5 : vector<8x128xf32>
    %cst_5 = arith.constant 0.000000e+00 : f32
    %7 = vector.broadcast %cst_5 : f32 to vector<8x128xf32>
    %8 = arith.cmpf ogt, %6, %7 : vector<8x128xf32>
    %cst_6 = arith.constant 0.00999999977 : f32
    %9 = vector.broadcast %cst_6 : f32 to vector<8x128xf32>
    %10 = arith.mulf %9, %6 : vector<8x128xf32>
    %11 = arith.select %8, %6, %10 : vector<8x128xi1>, vector<8x128xf32>
    %12 = arith.truncf %11 : vector<8x128xf32> to vector<8x128xbf16>
    %c0_7 = arith.constant 0 : index
    %c0_8 = arith.constant 0 : index
    %13 = vector.load %arg4[%c0_7, %c0_8] : memref<128x64xbf16, #tpu.memory_space<vmem>>, vector<128x64xbf16>
    %cst_9 = arith.constant dense<0.000000e+00> : vector<8x64xf32>
    %14 = tpu.matmul %12, %13, %cst_9 {dimension_numbers = #tpu.dot_dimension_numbers<[1], [0], [0], [1], [0, 0, 1, 1], [], []>} : vector<8x128xbf16>, vector<128x64xbf16>, vector<8x64xf32> -> vector<8x64xf32>
    %c0_10 = arith.constant 0 : index
    %c0_11 = arith.constant 0 : index
    %15 = vector.load %arg5[%c0_10, %c0_11] : memref<1x64xf32, #tpu.memory_space<vmem>>, vector<1x64xf32>
    %16 = vector.broadcast %15 : vector<1x64xf32> to vector<8x64xf32>
    %17 = arith.addf %14, %16 : vector<8x64xf32>
    %cst_12 = arith.constant 0.000000e+00 : f32
    %18 = vector.broadcast %cst_12 : f32 to vector<8x64xf32>
    %19 = arith.cmpf ogt, %17, %18 : vector<8x64xf32>
    %cst_13 = arith.constant 0.00999999977 : f32
    %20 = vector.broadcast %cst_13 : f32 to vector<8x64xf32>
    %21 = arith.mulf %20, %17 : vector<8x64xf32>
    %22 = arith.select %19, %17, %21 : vector<8x64xi1>, vector<8x64xf32>
    %23 = arith.truncf %22 : vector<8x64xf32> to vector<8x64xbf16>
    %c0_14 = arith.constant 0 : index
    %c0_15 = arith.constant 0 : index
    %24 = vector.load %arg6[%c0_14, %c0_15] : memref<64x128xbf16, #tpu.memory_space<vmem>>, vector<64x128xbf16>
    %cst_16 = arith.constant dense<0.000000e+00> : vector<8x128xf32>
    %25 = tpu.matmul %23, %24, %cst_16 {dimension_numbers = #tpu.dot_dimension_numbers<[1], [0], [0], [1], [0, 0, 1, 1], [], []>} : vector<8x64xbf16>, vector<64x128xbf16>, vector<8x128xf32> -> vector<8x128xf32>
    %26 = vector.extract_strided_slice %25 {offsets = [0, 0], sizes = [8, 4], strides = [1, 1]} : vector<8x128xf32> to vector<8x4xf32>
    %c0_17 = arith.constant 0 : index
    %c0_18 = arith.constant 0 : index
    %27 = vector.load %arg7[%c0_17, %c0_18] : memref<1x4xf32, #tpu.memory_space<vmem>>, vector<1x4xf32>
    %28 = vector.broadcast %27 : vector<1x4xf32> to vector<8x4xf32>
    %29 = arith.addf %26, %28 : vector<8x4xf32>
    %c0_19 = arith.constant 0 : index
    %c0_20 = arith.constant 0 : index
    %30 = vector.load %arg8[%c0_19, %c0_20] : memref<8x4xf32, #tpu.memory_space<vmem>>, vector<8x4xf32>
    tpu.vector_store %arg8[%c0_19, %c0_20], %29 {strides = array<i32>} : memref<8x4xf32, #tpu.memory_space<vmem>>, vector<8x4xf32>,
    return
  }
  func.func @transform_0(%arg0: i32) -> (i32, i32) {
    %c0_i32 = arith.constant 0 : i32
    %c0_i32_0 = arith.constant 0 : i32
    return %arg0, %c0_i32 : i32, i32
  }
  func.func @transform_1(%arg0: i32) -> (i32, i32) {
    %c0_i32 = arith.constant 0 : i32
    %c0_i32_0 = arith.constant 0 : i32
    %c0_i32_1 = arith.constant 0 : i32
    return %c0_i32, %c0_i32_0 : i32, i32
  }
  func.func @transform_2(%arg0: i32) -> (i32, i32) {
    %c0_i32 = arith.constant 0 : i32
    %c0_i32_0 = arith.constant 0 : i32
    %c0_i32_1 = arith.constant 0 : i32
    return %c0_i32, %c0_i32_0 : i32, i32
  }
  func.func @transform_3(%arg0: i32) -> (i32, i32) {
    %c0_i32 = arith.constant 0 : i32
    %c0_i32_0 = arith.constant 0 : i32
    %c0_i32_1 = arith.constant 0 : i32
    return %c0_i32, %c0_i32_0 : i32, i32
  }
  func.func @transform_4(%arg0: i32) -> (i32, i32) {
    %c0_i32 = arith.constant 0 : i32
    %c0_i32_0 = arith.constant 0 : i32
    %c0_i32_1 = arith.constant 0 : i32
    return %c0_i32, %c0_i32_0 : i32, i32
  }
  func.func @transform_5(%arg0: i32) -> (i32, i32) {
    %c0_i32 = arith.constant 0 : i32
    %c0_i32_0 = arith.constant 0 : i32
    %c0_i32_1 = arith.constant 0 : i32
    return %c0_i32, %c0_i32_0 : i32, i32
  }
  func.func @transform_6(%arg0: i32) -> (i32, i32) {
    %c0_i32 = arith.constant 0 : i32
    %c0_i32_0 = arith.constant 0 : i32
    %c0_i32_1 = arith.constant 0 : i32
    return %c0_i32, %c0_i32_0 : i32, i32
  }
  func.func @transform_7(%arg0: i32) -> (i32, i32) {
    %c0_i32 = arith.constant 0 : i32
    %c0_i32_0 = arith.constant 0 : i32
    return %arg0, %c0_i32 : i32, i32
  }
}

</mosaic_0001>

<llo_original>
// kernel: tpu_custom_call.1
$region0: #{tpu_custom_call.1}
  #allocation0 [shape = 'u32[]', space=smem, size = 0x4, offset = 0x4, fixed_abs, tag = 'smem constant byte address 0x4 - core index']
  #allocation1 [shape = 'u32[144,128]{1,0:T(1,128)}', space=vmem, size = 0x12000, scoped, tag = 'internal scratch']
  %s0 = inlined_call_operand.vmem [shape: f32[8,32], index: 0, kind: input, shape index: {}]
  %s1 = inlined_call_operand.vmem [shape: bf16[32,128], index: 1, kind: input, shape index: {}]
  %s2 = inlined_call_operand.vmem [shape: f32[1,128], index: 2, kind: input, shape index: {}]
  %s3 = inlined_call_operand.vmem [shape: bf16[128,64], index: 3, kind: input, shape index: {}]
  %s4 = inlined_call_operand.vmem [shape: f32[1,64], index: 4, kind: input, shape index: {}]
  %s5 = inlined_call_operand.vmem [shape: bf16[64,128], index: 5, kind: input, shape index: {}]
  %s6 = inlined_call_operand.vmem [shape: f32[1,4], index: 6, kind: input, shape index: {}]
  %s7 = inlined_call_operand.vmem [shape: f32[8,4], index: 7, kind: output, shape index: {}]
  %s8 = sld [smem:[#allocation0]]
  $region38: #{tpu_custom_call.1} parent=0
    _
  %s10 = ssub.s32 1, %s8
  %s11 = scalar_select 0, %s10, %s8
  // Predicated region
  $region2: #{tpu_custom_call.1} parent=0 // pred_check
    _
  $region3: #{tpu_custom_call.1} parent=0 // pred_check_branch
    %13 = sbr.rel (0) target = $region5
  $region4: #{tpu_custom_call.1} parent=0 // pred_region
    _
  $region5: #{tpu_custom_call.1} parent=0 // pred_fallthru
    _
  // Predicated region
  $region6: #{tpu_custom_call.1} parent=0 // pred_check
    _
  $region7: #{tpu_custom_call.1} parent=0 // pred_check_branch
    %15 = sbr.rel (0) target = $region9
  $region8: #{tpu_custom_call.1} parent=0 // pred_region
    _
  $region9: #{tpu_custom_call.1} parent=0 // pred_fallthru
    _
  // Predicated region
  $region10: #{tpu_custom_call.1} parent=0 // pred_check
    _
  $region11: #{tpu_custom_call.1} parent=0 // pred_check_branch
    %17 = sbr.rel (0) target = $region13
  $region12: #{tpu_custom_call.1} parent=0 // pred_region
    _
  $region13: #{tpu_custom_call.1} parent=0 // pred_fallthru
    _
  // Predicated region
  $region14: #{tpu_custom_call.1} parent=0 // pred_check
    _
  $region15: #{tpu_custom_call.1} parent=0 // pred_check_branch
    %19 = sbr.rel (0) target = $region17
  $region16: #{tpu_custom_call.1} parent=0 // pred_region
    _
  $region17: #{tpu_custom_call.1} parent=0 // pred_fallthru
    _
  // Predicated region
  $region18: #{tpu_custom_call.1} parent=0 // pred_check
    _
  $region19: #{tpu_custom_call.1} parent=0 // pred_check_branch
    %21 = sbr.rel (0) target = $region21
  $region20: #{tpu_custom_call.1} parent=0 // pred_region
    _
  $region21: #{tpu_custom_call.1} parent=0 // pred_fallthru
    _
  // Predicated region
  $region22: #{tpu_custom_call.1} parent=0 // pred_check
    _
  $region23: #{tpu_custom_call.1} parent=0 // pred_check_branch
    %23 = sbr.rel (0) target = $region25
  $region24: #{tpu_custom_call.1} parent=0 // pred_region
    _
  $region25: #{tpu_custom_call.1} parent=0 // pred_fallthru
    _
  // Predicated region
  $region26: #{tpu_custom_call.1} parent=0 // pred_check
    _
  $region27: #{tpu_custom_call.1} parent=0 // pred_check_branch
    %25 = sbr.rel (0) target = $region29
  $region28: #{tpu_custom_call.1} parent=0 // pred_region
    _
  $region29: #{tpu_custom_call.1} parent=0 // pred_fallthru
    _
  %v27 = vld [vmem:[%s0] sm:$0xff]
  %v28 = vpack.c.bf16 %v27, %v27
  %v29 = vld [vmem:[%s1] sm:$0xf]
  %v30 = vld [vmem:[%s1 + $0x4] sm:$0xf]
  %v31 = vld [vmem:[%s1 + $0x8] sm:$0xf]
  %v32 = vld [vmem:[%s1 + $0xc] sm:$0xf]
  %v33 = vld [vmem:[%s2] sm:$0x1]
  %v35 = vlaneseq
  %v36 = vshrl.u32 %v35, 7
  %v37 = vsub.s32 0, %v36
  %v38 = vrot.slane %v33, %v37
  %v44 = vunpack.c.l.b16 %v29
  %v45 = vunpack.c.l.b16 %v30
  %v46 = vunpack.c.l.b16 %v31
  %v47 = vunpack.c.l.b16 %v32
  %v48 = vpack.c.b16 %v45, %v44
  %v49 = vpack.c.b16 %v47, %v46
  %vm52 = vcmask 261120
  %v54 = vsel %vm52, %v28, 0
  %56 = vmatprep.subr.bf16.mxu0 0
  %57 = vmatpush1.bf16.msra.mxu0 0
  %58 = vmatprep.subr.bf16.mxu0 0
  %59 = vmatpush1.bf16.msra.mxu0 0
  %60 = vmatprep.subr.bf16.mxu0 0
  %61 = vmatpush1.bf16.msra.mxu0 0
  %62 = vmatprep.subr.bf16.mxu0 0
  %63 = vmatpush1.bf16.msra.mxu0 0
  %64 = vmatprep.subr.bf16.mxu0 0
  %65 = vmatpush1.bf16.msra.mxu0 0
  %66 = vmatprep.subr.bf16.mxu0 0
  %67 = vmatpush1.bf16.msra.mxu0 0
  %68 = vmatprep.subr.bf16.mxu0 0
  %69 = vmatpush1.bf16.msra.mxu0 %v49
  %70 = vmatprep.subr.bf16.mxu0 0
  %71 = vmatpush1.bf16.msra.mxu0 %v48
  %72 = vmatprep.subr.bf16.mxu0 0
  %73 = vmatpush2.bf16.msra.mxu0 0
  %74 = vmatprep.subr.bf16.mxu0 0
  %75 = vmatpush2.bf16.msra.mxu0 0
  %76 = vmatprep.subr.bf16.mxu0 0
  %77 = vmatpush2.bf16.msra.mxu0 0
  %78 = vmatprep.subr.bf16.mxu0 0
  %79 = vmatpush2.bf16.msra.mxu0 0
  %80 = vmatprep.subr.bf16.mxu0 0
  %81 = vmatpush2.bf16.msra.mxu0 0
  %82 = vmatprep.subr.bf16.mxu0 0
  %83 = vmatpush2.bf16.msra.mxu0 0
  %84 = vmatprep.subr.bf16.mxu0 0
  %85 = vmatpush2.bf16.msra.mxu0 0
  %86 = vmatprep.subr.bf16.mxu0 0
  %87 = vmatpush2.bf16.msra.mxu0 0
  %88 = vmatprep.mubr.bf16.mxu0 0
  %89 = vmatmul.mubr.bf16.gmra.mxu0 %v54
  %v90 = vpop.f32.mrf.mxu0
  %v91 = vadd.f32 %v38, %v90
  %v92 = vpop.f32.mrf.mxu0
  %v93 = vpop.f32.mrf.mxu0
  %v94 = vpop.f32.mrf.mxu0
  %95 = vdwg.mxu0
  %vm96 = vcmp.gt.f32.partialorder %v91, 0.0
  %v97 = vmul.f32 %v91, 0.01
  %v98 = vsel %vm96, %v91, %v97
  %v99 = vpack.c.bf16 %v98, %v98
  %v100 = vld [vmem:[%s3] sm:$0xf]
  %v101 = vld [vmem:[%s3 + $0x4] sm:$0xf]
  %v102 = vld [vmem:[%s3 + $0x8] sm:$0xf]
  %v103 = vld [vmem:[%s3 + $0xc] sm:$0xf]
  %v104 = vld [vmem:[%s3 + $0x10] sm:$0xf]
  %v105 = vld [vmem:[%s3 + $0x14] sm:$0xf]
  %v106 = vld [vmem:[%s3 + $0x18] sm:$0xf]
  %v107 = vld [vmem:[%s3 + $0x1c] sm:$0xf]
  %v108 = vld [vmem:[%s3 + $0x20] sm:$0xf]
  %v109 = vld [vmem:[%s3 + $0x24] sm:$0xf]
  %v110 = vld [vmem:[%s3 + $0x28] sm:$0xf]
  %v111 = vld [vmem:[%s3 + $0x2c] sm:$0xf]
  %v112 = vld [vmem:[%s3 + $0x30] sm:$0xf]
  %v113 = vld [vmem:[%s3 + $0x34] sm:$0xf]
  %v114 = vld [vmem:[%s3 + $0x38] sm:$0xf]
  %v115 = vld [vmem:[%s3 + $0x3c] sm:$0xf]
  %v116 = vld [vmem:[%s4] sm:$0x1]
  %v118 = vlaneseq
  %v119 = vshrl.u32 %v118, 7
  %v120 = vsub.s32 0, %v119
  %v121 = vrot.slane %v116, %v120
  %v139 = vunpack.c.l.b16 %v100
  %v140 = vunpack.c.l.b16 %v101
  %v141 = vunpack.c.l.b16 %v102
  %v142 = vunpack.c.l.b16 %v103
  %v143 = vunpack.c.l.b16 %v104
  %v144 = vunpack.c.l.b16 %v105
  %v145 = vunpack.c.l.b16 %v106
  %v146 = vunpack.c.l.b16 %v107
  %v147 = vunpack.c.l.b16 %v108
  %v148 = vunpack.c.l.b16 %v109
  %v149 = vunpack.c.l.b16 %v110
  %v150 = vunpack.c.l.b16 %v111
  %v151 = vunpack.c.l.b16 %v112
  %v152 = vunpack.c.l.b16 %v113
  %v153 = vunpack.c.l.b16 %v114
  %v154 = vunpack.c.l.b16 %v115
  %v155 = vpack.c.b16 %v140, %v139
  %v156 = vpack.c.b16 %v142, %v141
  %v157 = vpack.c.b16 %v144, %v143
  %v158 = vpack.c.b16 %v146, %v145
  %v159 = vpack.c.b16 %v148, %v147
  %v160 = vpack.c.b16 %v150, %v149
  %v161 = vpack.c.b16 %v152, %v151
  %v162 = vpack.c.b16 %v154, %v153
  %171 = vmatprep.subr.bf16.mxu0 0
  %172 = vmatpush1.bf16.msra.mxu0 %v162
  %173 = vmatprep.subr.bf16.mxu0 0
  %174 = vmatpush1.bf16.msra.mxu0 %v161
  %175 = vmatprep.subr.bf16.mxu0 0
  %176 = vmatpush1.bf16.msra.mxu0 %v160
  %177 = vmatprep.subr.bf16.mxu0 0
  %178 = vmatpush1.bf16.msra.mxu0 %v159
  %179 = vmatprep.subr.bf16.mxu0 0
  %180 = vmatpush1.bf16.msra.mxu0 %v158
  %181 = vmatprep.subr.bf16.mxu0 0
  %182 = vmatpush1.bf16.msra.mxu0 %v157
  %183 = vmatprep.subr.bf16.mxu0 0
  %184 = vmatpush1.bf16.msra.mxu0 %v156
  %185 = vmatprep.subr.bf16.mxu0 0
  %186 = vmatpush1.bf16.msra.mxu0 %v155
  %187 = vmatprep.subr.bf16.mxu0 0
  %188 = vmatpush2.bf16.msra.mxu0 0
  %189 = vmatprep.subr.bf16.mxu0 0
  %190 = vmatpush2.bf16.msra.mxu0 0
  %191 = vmatprep.subr.bf16.mxu0 0
  %192 = vmatpush2.bf16.msra.mxu0 0
  %193 = vmatprep.subr.bf16.mxu0 0
  %194 = vmatpush2.bf16.msra.mxu0 0
  %195 = vmatprep.subr.bf16.mxu0 0
  %196 = vmatpush2.bf16.msra.mxu0 0
  %197 = vmatprep.subr.bf16.mxu0 0
  %198 = vmatpush2.bf16.msra.mxu0 0
  %199 = vmatprep.subr.bf16.mxu0 0
  %200 = vmatpush2.bf16.msra.mxu0 0
  %201 = vmatprep.subr.bf16.mxu0 0
  %202 = vmatpush2.bf16.msra.mxu0 0
  %203 = vmatprep.mubr.bf16.mxu0 0
  %204 = vmatmul.mubr.bf16.gmra.mxu0 %v99
  %v205 = vpop.f32.mrf.mxu0
  %v206 = vadd.f32 %v121, %v205
  %v207 = vpop.f32.mrf.mxu0
  %v208 = vpop.f32.mrf.mxu0
  %v209 = vpop.f32.mrf.mxu0
  %210 = vdwg.mxu0
  %vm211 = vcmp.gt.f32.partialorder %v206, 0.0
  %v212 = vmul.f32 %v206, 0.01
  %v213 = vsel %vm211, %v206, %v212
  %v214 = vpack.c.bf16 %v213, %v213
  %v215 = vld [vmem:[%s5] sm:$0xf]
  %v216 = vld [vmem:[%s5 + $0x4] sm:$0xf]
  %v217 = vld [vmem:[%s5 + $0x8] sm:$0xf]
  %v218 = vld [vmem:[%s5 + $0xc] sm:$0xf]
  %v219 = vld [vmem:[%s5 + $0x10] sm:$0xf]
  %v220 = vld [vmem:[%s5 + $0x14] sm:$0xf]
  %v221 = vld [vmem:[%s5 + $0x18] sm:$0xf]
  %v222 = vld [vmem:[%s5 + $0x1c] sm:$0xf]
  %v231 = vunpack.c.l.b16 %v215
  %v232 = vunpack.c.l.b16 %v216
  %v233 = vunpack.c.l.b16 %v217
  %v234 = vunpack.c.l.b16 %v218
  %v235 = vunpack.c.l.b16 %v219
  %v236 = vunpack.c.l.b16 %v220
  %v237 = vunpack.c.l.b16 %v221
  %v238 = vunpack.c.l.b16 %v222
  %v239 = vpack.c.b16 %v232, %v231
  %v240 = vpack.c.b16 %v234, %v233
  %v241 = vpack.c.b16 %v236, %v235
  %v242 = vpack.c.b16 %v238, %v237
  %vm247 = vcmask 523264
  %v249 = vsel %vm247, %v214, 0
  %251 = vmatprep.subr.bf16.mxu0 0
  %252 = vmatpush1.bf16.msra.mxu0 0
  %253 = vmatprep.subr.bf16.mxu0 0
  %254 = vmatpush1.bf16.msra.mxu0 0
  %255 = vmatprep.subr.bf16.mxu0 0
  %256 = vmatpush1.bf16.msra.mxu0 0
  %257 = vmatprep.subr.bf16.mxu0 0
  %258 = vmatpush1.bf16.msra.mxu0 0
  %259 = vmatprep.subr.bf16.mxu0 0
  %260 = vmatpush1.bf16.msra.mxu0 %v242
  %261 = vmatprep.subr.bf16.mxu0 0
  %262 = vmatpush1.bf16.msra.mxu0 %v241
  %263 = vmatprep.subr.bf16.mxu0 0
  %264 = vmatpush1.bf16.msra.mxu0 %v240
  %265 = vmatprep.subr.bf16.mxu0 0
  %266 = vmatpush1.bf16.msra.mxu0 %v239
  %267 = vmatprep.subr.bf16.mxu0 0
  %268 = vmatpush2.bf16.msra.mxu0 0
  %269 = vmatprep.subr.bf16.mxu0 0
  %270 = vmatpush2.bf16.msra.mxu0 0
  %271 = vmatprep.subr.bf16.mxu0 0
  %272 = vmatpush2.bf16.msra.mxu0 0
  %273 = vmatprep.subr.bf16.mxu0 0
  %274 = vmatpush2.bf16.msra.mxu0 0
  %275 = vmatprep.subr.bf16.mxu0 0
  %276 = vmatpush2.bf16.msra.mxu0 0
  %277 = vmatprep.subr.bf16.mxu0 0
  %278 = vmatpush2.bf16.msra.mxu0 0
  %279 = vmatprep.subr.bf16.mxu0 0
  %280 = vmatpush2.bf16.msra.mxu0 0
  %281 = vmatprep.subr.bf16.mxu0 0
  %282 = vmatpush2.bf16.msra.mxu0 0
  %283 = vmatprep.mubr.bf16.mxu0 0
  %284 = vmatmul.mubr.bf16.gmra.mxu0 %v249
  %v285 = vpop.f32.mrf.mxu0
  %v286 = vadd.f32 0.0, %v285
  %v287 = vpop.f32.mrf.mxu0
  %v288 = vpop.f32.mrf.mxu0
  %v289 = vpop.f32.mrf.mxu0
  %290 = vdwg.mxu0
  %v291 = vld [vmem:[%s6] sm:$0x1]
  %v293 = vlaneseq
  %v294 = vshrl.u32 %v293, 7
  %v295 = vsub.s32 0, %v294
  %v296 = vrot.slane %v291, %v295
  %v298 = vadd.f32 %v286, %v296
  %vm299 = vcmask 31744
  %300 = vst.msk [vmem:[%s7] sm:$0xff] %vm299, %v298
  // Predicated region
  $region30: #{tpu_custom_call.1} parent=0 // pred_check
    _
  $region31: #{tpu_custom_call.1} parent=0 // pred_check_branch
    %302 = sbr.rel (0) target = $region33
  $region32: #{tpu_custom_call.1} parent=0 // pred_region
    _
  $region33: #{tpu_custom_call.1} parent=0 // pred_fallthru
    _
  // Predicated region
  $region34: #{tpu_custom_call.1} parent=0 // pred_check
    _
  $region35: #{tpu_custom_call.1} parent=0 // pred_check_branch
    %304 = sbr.rel (0) target = $region37
  $region36: #{tpu_custom_call.1} parent=0 // pred_region
    _
  $region37: #{tpu_custom_call.1} parent=0 // pred_fallthru
    _

</llo_original>
